<compile_context>
chip_gen: v5e
topology: v5e:2x2
jax: 0.10.0
libtpu: 0.0.40
codegen_flags: <defaults>
</compile_context>

<pallas_src>
import functools
import math

import jax
import jax.numpy as jnp
from jax.experimental import pallas as pl
from jax.experimental.pallas import tpu as pltpu


def _round_up(x, m):
    return ((x + m - 1) // m) * m


def _choose_tile(n, target, align, min_tiles=1):
    """Pick a tile size (multiple of `align`, ~<= target) keeping padding of
    `n` small.  Returns (tile, padded_n) with padded_n a multiple of tile."""
    n_al = _round_up(n, align)
    tgt = max(align, _round_up(min(target, n_al), align))
    tiles = max(min_tiles, -(-n_al // tgt))
    tile = _round_up(-(-n // tiles), align)
    n_pad = _round_up(n, tile)
    return tile, n_pad


# --------------------------------------------------------------------------
# Step 1: support = X @ W  (computed once, tiled over rows, lane-dense)
# --------------------------------------------------------------------------
def _support_kernel(x_ref, w_ref, s_ref):
    s_ref[...] = jnp.dot(
        x_ref[...], w_ref[...], preferred_element_type=jnp.float32
    ).astype(s_ref.dtype)


# --------------------------------------------------------------------------
# Step 2: out = adj @ support + bias
#   resident variant: support lives fully in VMEM (one DMA), sliced per k-step
#   streamed variant: support k-tiles streamed alongside adj tiles
# Both accumulate directly into the resident f32 output block (no scratch).
# --------------------------------------------------------------------------
def _aggregate_resident_kernel(adj_ref, s_ref, b_ref, out_ref, *, tk):
    k = pl.program_id(1)

    @pl.when(k == 0)
    def _():
        out_ref[...] = jnp.zeros_like(out_ref)

    ks = pl.multiple_of(k * tk, 128)
    out_ref[...] += jnp.dot(
        adj_ref[...], s_ref[pl.ds(ks, tk), :], preferred_element_type=jnp.float32
    )

    @pl.when(k == pl.num_programs(1) - 1)
    def _():
        out_ref[...] += b_ref[...]


def _aggregate_streamed_kernel(adj_ref, s_ref, b_ref, out_ref):
    k = pl.program_id(1)

    @pl.when(k == 0)
    def _():
        out_ref[...] = jnp.zeros_like(out_ref)

    out_ref[...] += jnp.dot(
        adj_ref[...], s_ref[...], preferred_element_type=jnp.float32
    )

    @pl.when(k == pl.num_programs(1) - 1)
    def _():
        out_ref[...] += b_ref[...]


def graph_convolution(x, weight, adj, bias=None, *, tm=1024, tk=2048,
                      compute_dtype=jnp.bfloat16,
                      support_resident_bytes=24 * 1024 * 1024):
    """GCN layer forward: adj @ (x @ weight) + bias.

    x:      (N, F_in)     node features
    weight: (F_in, F_out) dense weight
    adj:    (N, N)        dense (row-normalized) adjacency; pass it already in
                          `compute_dtype` (and N aligned) to skip the pad/cast pass
    bias:   (F_out,) or None
    """
    n, f_in = x.shape
    f_out = weight.shape[1]
    itemsize = jnp.dtype(compute_dtype).itemsize

    # Lane-dense feature dims (multiples of 128).
    f_pad = _round_up(max(f_out, 128), 128)
    f_in_pad = _round_up(max(f_in, 128), 128)

    # Row tile (sublane, mult of 8) with >= 2 tiles so both v7x TCs get work;
    # reduction/column tile (lane, mult of 128) sized to minimize N padding.
    tm_eff, n_rows = _choose_tile(n, tm, 8, min_tiles=2)
    tk_eff, n_cols = _choose_tile(n, tk, 128, min_tiles=1)

    # Keep support resident in VMEM when it comfortably fits (v7x-safe budget).
    support_bytes = n_cols * f_pad * itemsize
    resident = support_bytes <= support_resident_bytes

    # ---- pad inputs (zero padding is exact: padded adj cols contribute 0) ----
    x_pad = jnp.zeros((n_cols, f_in_pad), jnp.float32).at[:n, :f_in].set(
        x.astype(jnp.float32))
    w_pad = jnp.zeros((f_in_pad, f_pad), jnp.float32).at[:f_in, :f_out].set(
        weight.astype(jnp.float32))
    if bias is None:
        b_pad = jnp.zeros((1, f_pad), jnp.float32)
    else:
        b_pad = jnp.zeros((1, f_pad), jnp.float32).at[0, :f_out].set(
            bias.astype(jnp.float32))

    # Fast path: if the producer already supplies an aligned adjacency there is
    # no extra O(N^2) pad pass (and no cast pass if it is already compute_dtype).
    if adj.shape == (n_rows, n_cols):
        adj_pad = adj.astype(compute_dtype)
    else:
        adj_pad = jnp.zeros((n_rows, n_cols), compute_dtype).at[:n, :n].set(
            adj.astype(compute_dtype))

    # ---- step 1: support = X @ W (computed once, tiled over rows) ----
    support = pl.pallas_call(
        _support_kernel,
        out_shape=jax.ShapeDtypeStruct((n_cols, f_pad), compute_dtype),
        grid_spec=pltpu.PrefetchScalarGridSpec(
            num_scalar_prefetch=0,
            grid=(n_cols // tk_eff,),
            in_specs=[
                pl.BlockSpec((tk_eff, f_in_pad), lambda i: (i, 0)),
                pl.BlockSpec((f_in_pad, f_pad), lambda i: (0, 0)),
            ],
            out_specs=pl.BlockSpec((tk_eff, f_pad), lambda i: (i, 0)),
        ),
        compiler_params=pltpu.CompilerParams(
            dimension_semantics=("parallel",),
        ),
    )(x_pad, w_pad)

    # ---- step 2: out = adj @ support + bias ----
    if resident:
        agg_kernel = functools.partial(_aggregate_resident_kernel, tk=tk_eff)
        support_spec = pl.BlockSpec((n_cols, f_pad), lambda i, k: (0, 0))
        support_vmem = support_bytes
    else:
        agg_kernel = _aggregate_streamed_kernel
        support_spec = pl.BlockSpec((tk_eff, f_pad), lambda i, k: (k, 0))
        support_vmem = 2 * tk_eff * f_pad * itemsize

    # VMEM budget derived from actual buffers (double-buffered adj / output).
    adj_vmem = 2 * tm_eff * tk_eff * itemsize
    out_vmem = 2 * tm_eff * f_pad * 4
    bias_vmem = 2 * f_pad * 4
    vmem_need = adj_vmem + support_vmem + out_vmem + bias_vmem
    vmem_limit = int(min(max(int(vmem_need * 1.5), 32 * 1024 * 1024),
                         110 * 1024 * 1024))

    out_pad = pl.pallas_call(
        agg_kernel,
        out_shape=jax.ShapeDtypeStruct((n_rows, f_pad), jnp.float32),
        grid_spec=pltpu.PrefetchScalarGridSpec(
            num_scalar_prefetch=0,
            grid=(n_rows // tm_eff, n_cols // tk_eff),
            in_specs=[
                pl.BlockSpec((tm_eff, tk_eff), lambda i, k: (i, k)),  # adj tile
                support_spec,                                         # support
                pl.BlockSpec((1, f_pad), lambda i, k: (0, 0)),        # bias
            ],
            out_specs=pl.BlockSpec((tm_eff, f_pad), lambda i, k: (i, 0)),
        ),
        compiler_params=pltpu.CompilerParams(
            dimension_semantics=("parallel", "arbitrary"),
            vmem_limit_bytes=vmem_limit,
        ),
    )(adj_pad, support, b_pad)

    return out_pad[:n, :f_out]


if __name__ == "__main__":
    # Small, deterministic example: N=300 nodes, in_features=48, out_features=16.
    # (Non-multiple N exercises padding; small tile overrides exercise the
    #  multi-tile accumulation grid even at this size.)
    N, F_IN, F_OUT = 300, 48, 16
    key = jax.random.PRNGKey(0)
    k_x, k_adj, k_w, k_b = jax.random.split(key, 4)

    x = jax.random.normal(k_x, (N, F_IN), dtype=jnp.float32)

    # Row-normalized dense adjacency with self loops (~10% density).
    adj_raw = (jax.random.uniform(k_adj, (N, N)) < 0.1).astype(jnp.float32)
    adj = adj_raw + jnp.eye(N, dtype=jnp.float32)
    deg = jnp.sum(adj, axis=1, keepdims=True)
    adj = adj / deg

    # Parameters, matching reset_parameters(): uniform(-stdv, stdv), stdv=1/sqrt(out)
    stdv = 1.0 / math.sqrt(F_OUT)
    weight = jax.random.uniform(k_w, (F_IN, F_OUT), minval=-stdv, maxval=stdv,
                                dtype=jnp.float32)
    bias = jax.random.uniform(k_b, (F_OUT,), minval=-stdv, maxval=stdv,
                              dtype=jnp.float32)

    # Full-precision reference (same math as the PyTorch forward).
    ref = jnp.dot(adj, jnp.dot(x, weight, precision=jax.lax.Precision.HIGHEST),
                  precision=jax.lax.Precision.HIGHEST) + bias

    # 1) f32 compute path, small tiles (multi-tile grid, resident support):
    #    tight structural/numerical check.
    out_f32 = graph_convolution(x, weight, adj, bias, tm=128, tk=128,
                                compute_dtype=jnp.float32)
    out_f32 = jax.block_until_ready(out_f32)
    assert out_f32.shape == (N, F_OUT)
    assert jnp.allclose(out_f32, ref, atol=1e-4, rtol=1e-4), "f32 path mismatch"

    # 2) Default bf16-streamed path (large tiles, resident support).
    out_bf16 = graph_convolution(x, weight, adj, bias)
    out_bf16 = jax.block_until_ready(out_bf16)
    assert out_bf16.shape == (N, F_OUT)
    assert jnp.allclose(out_bf16, ref, atol=5e-2, rtol=5e-2), "bf16 path mismatch"

    # 3) Force the streamed-support fallback (large-N code path) for coverage.
    out_stream = graph_convolution(x, weight, adj, bias, tm=128, tk=128,
                                   support_resident_bytes=0)
    out_stream = jax.block_until_ready(out_stream)
    assert out_stream.shape == (N, F_OUT)
    assert jnp.allclose(out_stream, ref, atol=5e-2, rtol=5e-2), "streamed mismatch"

    print("KERNEL_OK")
</pallas_src>

<mosaic_0001>
module attributes {stable_mosaic.version = 11 : i64} {
  func.func @_support_kernel(%arg0: i32, %arg1: memref<128x128xf32, #tpu.memory_space<vmem>>, %arg2: memref<128x128xf32, #tpu.memory_space<vmem>>, %arg3: memref<128x128xf32, #tpu.memory_space<vmem>>) attributes {dimension_semantics = [#tpu.dimension_semantics<parallel>], iteration_bounds = array<i64: 3>, scalar_prefetch = 0 : i64, scratch_operands = 0 : i64, tpu.core_type = #tpu.core_type<tc>, window_params = [{transform_indices = @transform_0, window_bounds = array<i64: 128, 128>}, {pipeline_mode = #tpu.pipeline_mode<synchronous>, transform_indices = @transform_1, window_bounds = array<i64: 128, 128>}, {transform_indices = @transform_2, window_bounds = array<i64: 128, 128>}]} {
    %c0 = arith.constant 0 : index
    %c0_0 = arith.constant 0 : index
    %0 = vector.load %arg1[%c0, %c0_0] : memref<128x128xf32, #tpu.memory_space<vmem>>, vector<128x128xf32>
    %c0_1 = arith.constant 0 : index
    %c0_2 = arith.constant 0 : index
    %1 = vector.load %arg2[%c0_1, %c0_2] : memref<128x128xf32, #tpu.memory_space<vmem>>, vector<128x128xf32>
    %cst = arith.constant dense<0.000000e+00> : vector<128x128xf32>
    %2 = tpu.matmul %0, %1, %cst {dimension_numbers = #tpu.dot_dimension_numbers<[1], [0], [0], [1], [0, 0, 1, 1], [], []>} : vector<128x128xf32>, vector<128x128xf32>, vector<128x128xf32> -> vector<128x128xf32>
    %c0_3 = arith.constant 0 : index
    %c0_4 = arith.constant 0 : index
    %3 = vector.load %arg3[%c0_3, %c0_4] : memref<128x128xf32, #tpu.memory_space<vmem>>, vector<128x128xf32>
    tpu.vector_store %arg3[%c0_3, %c0_4], %2 {strides = array<i32>} : memref<128x128xf32, #tpu.memory_space<vmem>>, vector<128x128xf32>,
    return
  }
  func.func @transform_0(%arg0: i32) -> (i32, i32) {
    %c0_i32 = arith.constant 0 : i32
    %c0_i32_0 = arith.constant 0 : i32
    return %arg0, %c0_i32 : i32, i32
  }
  func.func @transform_1(%arg0: i32) -> (i32, i32) {
    %c0_i32 = arith.constant 0 : i32
    %c0_i32_0 = arith.constant 0 : i32
    %c0_i32_1 = arith.constant 0 : i32
    return %c0_i32, %c0_i32_0 : i32, i32
  }
  func.func @transform_2(%arg0: i32) -> (i32, i32) {
    %c0_i32 = arith.constant 0 : i32
    %c0_i32_0 = arith.constant 0 : i32
    return %arg0, %c0_i32 : i32, i32
  }
}

</mosaic_0001>

<llo_original>
// kernel: tpu_custom_call.1
$region0: #{tpu_custom_call.1}
  #allocation0 [shape = 'u32[]', space=smem, size = 0x4, offset = 0x4, fixed_abs, tag = 'smem constant byte address 0x4 - core index']
  #allocation1 [shape = 'u32[72,128]{1,0:T(1,128)}', space=vmem, size = 0x9000, scoped, tag = 'internal scratch']
  %s0 = inlined_call_operand.hbm [shape: f32[384,128], index: 0, kind: input, shape index: {}]
  %s1 = inlined_call_operand.hbm [shape: f32[128,128], index: 1, kind: input, shape index: {}]
  %s2 = inlined_call_operand.hbm [shape: f32[384,128], index: 2, kind: output, shape index: {}]
  %s3 = sld [smem:[#allocation0]]
  $region49: #{tpu_custom_call.1} parent=0
    _
  %s5 = ssub.s32 1, %s3
  %s6 = scalar_select 0, %s5, %s3
  $region1: #{tpu_custom_call.1} parent=0
    #allocation2 [shape = 'u8[131072]{0}', space=vmem, size = 0x20000, scoped, tag = 'input window, operand 0']
    #allocation3 [shape = 's32[2]{0}', space=sflag, size = 0x8, scoped, tag = 'scoped memory for tpu_custom_call.1']
    #allocation4 [shape = 's32[2]{0}', space=sflag, size = 0x8, scoped, tag = 'scoped memory for tpu_custom_call.1']
    #allocation5 [shape = 'u8[65536]{0}', space=vmem, size = 0x10000, scoped, tag = 'input window, operand 1, single buffered']
    #allocation6 [shape = 's32[1]{0}', space=sflag, size = 0x4, scoped, tag = 'scoped memory for tpu_custom_call.1']
    #allocation7 [shape = 'u8[131072]{0}', space=vmem, size = 0x20000, scoped, tag = 'output window, operand 0']
    %7 = vsyncpa [#allocation3], 0
    %s8 = scalar_lea.sflag [#allocation3], 1
    %9 = vsyncpa %s8, 0
    %10 = vsyncpa [#allocation6], 0
    %11 = vsyncpa [#allocation4], 0
    %s12 = scalar_lea.sflag [#allocation4], 1
    %13 = vsyncpa %s12, 0
    loop: start=0, step=1, limit=5
    $region2: #{tpu_custom_call.1} parent=1 // loop_pre_header
      _
    $region3: #{tpu_custom_call.1} parent=1 // loop_header
      %s15 = sphi 0, %s19
      %p16 = scmp.ge.s32.totalorder %s15, 5
      %s25 = sphi 0, %s27
      %s28 = sphi 0, %s25
      %s29 = sphi 0, %s28
      %s45 = sphi 0, %s29
      %s49 = sphi 0, %s49
      %s51 = sphi 0, %s49
      %s52 = sphi 0, %s51
      %s66 = sphi 0, %s52
      %s72 = sphi 0, %s74
      %s75 = sphi 0, %s72
      %s76 = sphi 0, %s75
      %s92 = sphi 0, %s76
    $region4: #{tpu_custom_call.1} parent=1 // loop_header_branch
      %18 = sbr.rel (%p16) target = $region8
    $region5: #{tpu_custom_call.1} parent=1 // loop_body
      %s20 = ssub.s32 %s15, 1
      %s21 = ssub.s32 %s15, 2
      %s22 = sadd.s32 %s15, 1
      %s23 = ssub.s32 %s15, %s22
      %p24 = scmp.eq.s32.totalorder %s23, 0
      %s26 = sadd.s32 %s25, 1
      %s27 = scalar_select %p24, %s25, %s26
      %p30 = pneg %p24
      %p31 = scmp.eq.s32.totalorder %s15, 2
      %p32 = por %p30, %p31
      %p33 = scmp.ne.s32.totalorder %s25, %s28
      %p34 = scmp.eq.s32.totalorder %s15, 0
      %p35 = por %p33, %p34
      %p36 = scmp.ne.s32.totalorder %s25, %s28
      %p37 = scmp.eq.s32.totalorder %s20, 2
      %p38 = por %p36, %p37
      %p39 = scmp.ne.s32.totalorder %s28, %s29
      %p40 = scmp.eq.s32.totalorder %s20, 0
      %p41 = por %p39, %p40
      %p42 = scmp.ne.s32.totalorder %s28, %s29
      %p43 = scmp.eq.s32.totalorder %s21, 2
      %p44 = por %p42, %p43
      %p46 = scmp.ne.s32.totalorder %s29, %s45
      %p47 = scmp.eq.s32.totalorder %s21, 0
      %p48 = por %p46, %p47
      %s50 = sadd.s32 %s49, 1
      %p53 = scmp.eq.s32.totalorder %s15, 2
      %p54 = scmp.ne.s32.totalorder %s49, %s51
      %p55 = scmp.eq.s32.totalorder %s15, 0
      %p56 = por %p54, %p55
      %p57 = scmp.ne.s32.totalorder %s49, %s51
      %p58 = scmp.eq.s32.totalorder %s20, 2
      %p59 = por %p57, %p58
      %p60 = scmp.ne.s32.totalorder %s51, %s52
      %p61 = scmp.eq.s32.totalorder %s20, 0
      %p62 = por %p60, %p61
      %p63 = scmp.ne.s32.totalorder %s51, %s52
      %p64 = scmp.eq.s32.totalorder %s21, 2
      %p65 = por %p63, %p64
      %p67 = scmp.ne.s32.totalorder %s52, %s66
      %p68 = scmp.eq.s32.totalorder %s21, 0
      %p69 = por %p67, %p68
      %s70 = ssub.s32 %s15, %s22
      %p71 = scmp.eq.s32.totalorder %s70, 0
      %s73 = sadd.s32 %s72, 1
      %s74 = scalar_select %p71, %s72, %s73
      %p77 = pneg %p71
      %p78 = scmp.eq.s32.totalorder %s15, 2
      %p79 = por %p77, %p78
      %p80 = scmp.ne.s32.totalorder %s72, %s75
      %p81 = scmp.eq.s32.totalorder %s15, 0
      %p82 = por %p80, %p81
      %p83 = scmp.ne.s32.totalorder %s72, %s75
      %p84 = scmp.eq.s32.totalorder %s20, 2
      %p85 = por %p83, %p84
      %p86 = scmp.ne.s32.totalorder %s75, %s76
      %p87 = scmp.eq.s32.totalorder %s20, 0
      %p88 = por %p86, %p87
      %p89 = scmp.ne.s32.totalorder %s75, %s76
      %p90 = scmp.eq.s32.totalorder %s21, 2
      %p91 = por %p89, %p90
      %p93 = scmp.ne.s32.totalorder %s76, %s92
      %p94 = scmp.eq.s32.totalorder %s21, 0
      %p95 = por %p93, %p94
      %p96 = scmp.le.s32.totalorder 1, %s15
      %p97 = scmp.lt.s32.totalorder %s15, 4
      %p98 = pnand %p96, %p97
      %p99 = pneg %p98
      // Predicated region
      $region9: #{tpu_custom_call.1} parent=5 // pred_check
        _
      $region10: #{tpu_custom_call.1} parent=5 // pred_check_branch
        %101 = sbr.rel (%p98) target = $region12
      $region11: #{tpu_custom_call.1} parent=5 // pred_region
        %s102 = ssub.s32 %s15, 1
        // Predicated region
        $region13: #{tpu_custom_call.1} parent=11 // pred_check
          %p103 = pneg %p62
        $region14: #{tpu_custom_call.1} parent=11 // pred_check_branch
          %105 = sbr.rel (%p103) target = $region16
        $region15: #{tpu_custom_call.1} parent=11 // pred_region
          %107 = vsyncadd [#allocation6], 0
          %s108 = sshll.u32 %s1, 4
          %s109 = int_to_ptr.hbm [resolvable:$true] %s108
          %s110 = sshll.u32 [#allocation5], 4
          %s111 = int_to_ptr.vmem [resolvable:$true] %s110
          %116 = dma.hbm_to_vmem [thread:$0]  %s109, 2048, %s111, [#allocation6], 128, 128, 8
        $region16: #{tpu_custom_call.1} parent=11 // pred_fallthru
          _
      $region12: #{tpu_custom_call.1} parent=5 // pred_fallthru
        _
      %p117 = scmp.lt.s32.totalorder %s15, 3
      // Predicated region
      $region17: #{tpu_custom_call.1} parent=5 // pred_check
        %p118 = pneg %p117
      $region18: #{tpu_custom_call.1} parent=5 // pred_check_branch
        %120 = sbr.rel (%p118) target = $region20
      $region19: #{tpu_custom_call.1} parent=5 // pred_region
        // Predicated region
        $region21: #{tpu_custom_call.1} parent=19 // pred_check
          %p121 = pneg %p35
        $region22: #{tpu_custom_call.1} parent=19 // pred_check_branch
          %123 = sbr.rel (%p121) target = $region24
        $region23: #{tpu_custom_call.1} parent=19 // pred_region
          %s124 = sand.u32 %s25, 1
          %s125 = scalar_lea.sflag [#allocation3], %s124
          %s126 = sand.u32 %s25, 1
          %s127 = smul.addr %s126, 128
          %s128 = scalar_lea.vmem [#allocation2], %s127
          %s129 = smul.u32 16, %s15
          %131 = vsyncadd %s125, 0
          %s132 = smul.addr %s129, 8
          %s133 = scalar_lea.hbm %s0, %s132
          %s134 = sshll.u32 %s133, 4
          %s135 = int_to_ptr.hbm [resolvable:$true] %s134
          %s136 = sshll.u32 %s128, 4
          %s137 = int_to_ptr.vmem [resolvable:$true] %s136
          %142 = dma.hbm_to_vmem [thread:$0]  %s135, 2048, %s137, %s125, 128, 128, 8
        $region24: #{tpu_custom_call.1} parent=19 // pred_fallthru
          _
      $region20: #{tpu_custom_call.1} parent=5 // pred_fallthru
        _
      %p143 = scmp.le.s32.totalorder 1, %s15
      %p144 = scmp.lt.s32.totalorder %s15, 4
      %p145 = pnand %p143, %p144
      %p146 = pneg %p145
      // Predicated region
      $region25: #{tpu_custom_call.1} parent=5 // pred_check
        _
      $region26: #{tpu_custom_call.1} parent=5 // pred_check_branch
        %148 = sbr.rel (%p145) target = $region28
      $region27: #{tpu_custom_call.1} parent=5 // pred_region
        %s149 = ssub.s32 %s15, 1
        %s150 = sand.u32 %s28, 1
        %s151 = scalar_lea.sflag [#allocation3], %s150
        %s152 = sand.u32 %s28, 1
        %s153 = smul.addr %s152, 128
        %s154 = scalar_lea.vmem [#allocation2], %s153
        // Predicated region
        $region29: #{tpu_custom_call.1} parent=27 // pred_check
          %p155 = pneg %p41
        $region30: #{tpu_custom_call.1} parent=27 // pred_check_branch
          %157 = sbr.rel (%p155) target = $region32
        $region31: #{tpu_custom_call.1} parent=27 // pred_region
          %159 = dma.done %s151, 2048
        $region32: #{tpu_custom_call.1} parent=27 // pred_fallthru
          _
        // Predicated region
        $region33: #{tpu_custom_call.1} parent=27 // pred_check
          %p160 = pneg %p62
        $region34: #{tpu_custom_call.1} parent=27 // pred_check_branch
          %162 = sbr.rel (%p160) target = $region36
        $region35: #{tpu_custom_call.1} parent=27 // pred_region
          %164 = dma.done [#allocation6], 2048
        $region36: #{tpu_custom_call.1} parent=27 // pred_fallthru
          _
        %s165 = sand.u32 %s28, 1
        %s166 = scalar_lea.sflag [#allocation3], %s165
        %s167 = sand.u32 %s28, 1
        %s168 = smul.addr %s167, 128
        %s169 = scalar_lea.vmem [#allocation2], %s168
        %p170 = pneg %p41
        %p171 = pneg %p38
        %p172 = pneg %p62
        %p173 = pneg %p59
        %p174 = pneg %p88
        %p175 = pneg %p85
        %s176 = sand.u32 %s75, 1
        %s177 = scalar_lea.sflag [#allocation4], %s176
        %s178 = sand.u32 %s75, 1
        %s179 = smul.addr %s178, 128
        %s180 = scalar_lea.vmem [#allocation7], %s179
        %s181 = smul.u32 16, %s20
        %s182 = smul.u32 16, %s20
        %v183 = vld [vmem:[%s154] sm:$0xff]
        %v184 = vld [vmem:[%s154 + $0x8] sm:$0xff]
        %v185 = vld [vmem:[%s154 + $0x10] sm:$0xff]
        %v186 = vld [vmem:[%s154 + $0x18] sm:$0xff]
        %v187 = vld [vmem:[%s154 + $0x20] sm:$0xff]
        %v188 = vld [vmem:[%s154 + $0x28] sm:$0xff]
        %v189 = vld [vmem:[%s154 + $0x30] sm:$0xff]
        %v190 = vld [vmem:[%s154 + $0x38] sm:$0xff]
        %v191 = vld [vmem:[%s154 + $0x40] sm:$0xff]
        %v192 = vld [vmem:[%s154 + $0x48] sm:$0xff]
        %v193 = vld [vmem:[%s154 + $0x50] sm:$0xff]
        %v194 = vld [vmem:[%s154 + $0x58] sm:$0xff]
        %v195 = vld [vmem:[%s154 + $0x60] sm:$0xff]
        %v196 = vld [vmem:[%s154 + $0x68] sm:$0xff]
        %v197 = vld [vmem:[%s154 + $0x70] sm:$0xff]
        %v198 = vld [vmem:[%s154 + $0x78] sm:$0xff]
        %v199 = vld [vmem:[#allocation5] sm:$0xff]
        %v200 = vld [vmem:[#allocation5 + $0x8] sm:$0xff]
        %v201 = vld [vmem:[#allocation5 + $0x10] sm:$0xff]
        %v202 = vld [vmem:[#allocation5 + $0x18] sm:$0xff]
        %v203 = vld [vmem:[#allocation5 + $0x20] sm:$0xff]
        %v204 = vld [vmem:[#allocation5 + $0x28] sm:$0xff]
        %v205 = vld [vmem:[#allocation5 + $0x30] sm:$0xff]
        %v206 = vld [vmem:[#allocation5 + $0x38] sm:$0xff]
        %v207 = vld [vmem:[#allocation5 + $0x40] sm:$0xff]
        %v208 = vld [vmem:[#allocation5 + $0x48] sm:$0xff]
        %v209 = vld [vmem:[#allocation5 + $0x50] sm:$0xff]
        %v210 = vld [vmem:[#allocation5 + $0x58] sm:$0xff]
        %v211 = vld [vmem:[#allocation5 + $0x60] sm:$0xff]
        %v212 = vld [vmem:[#allocation5 + $0x68] sm:$0xff]
        %v213 = vld [vmem:[#allocation5 + $0x70] sm:$0xff]
        %v214 = vld [vmem:[#allocation5 + $0x78] sm:$0xff]
        %215 = vmatpush.msra.mxu0 %v214
        %216 = vmatpush.msra.mxu0 %v213
        %217 = vmatpush.msra.mxu0 %v212
        %218 = vmatpush.msra.mxu0 %v211
        %219 = vmatpush.msra.mxu0 %v210
        %220 = vmatpush.msra.mxu0 %v209
        %221 = vmatpush.msra.mxu0 %v208
        %222 = vmatpush.msra.mxu0 %v207
        %223 = vmatpush.msra.mxu0 %v206
        %224 = vmatpush.msra.mxu0 %v205
        %225 = vmatpush.msra.mxu0 %v204
        %226 = vmatpush.msra.mxu0 %v203
        %227 = vmatpush.msra.mxu0 %v202
        %228 = vmatpush.msra.mxu0 %v201
        %229 = vmatpush.msra.mxu0 %v200
        %230 = vmatpush.msra.mxu0 %v199
        %231 = vmatmul.f32.gmra.mxu0 %v183
        %v232 = vpop.f32.mrf.mxu0
        %v233 = vadd.f32 0.0, %v232
        %234 = vmatmul.f32.gmra.mxu0 %v184
        %v235 = vpop.f32.mrf.mxu0
        %v236 = vadd.f32 0.0, %v235
        %237 = vmatmul.f32.gmra.mxu0 %v185
        %v238 = vpop.f32.mrf.mxu0
        %v239 = vadd.f32 0.0, %v238
        %240 = vmatmul.f32.gmra.mxu0 %v186
        %v241 = vpop.f32.mrf.mxu0
        %v242 = vadd.f32 0.0, %v241
        %243 = vmatmul.f32.gmra.mxu0 %v187
        %v244 = vpop.f32.mrf.mxu0
        %v245 = vadd.f32 0.0, %v244
        %246 = vmatmul.f32.gmra.mxu0 %v188
        %v247 = vpop.f32.mrf.mxu0
        %v248 = vadd.f32 0.0, %v247
        %249 = vmatmul.f32.gmra.mxu0 %v189
        %v250 = vpop.f32.mrf.mxu0
        %v251 = vadd.f32 0.0, %v250
        %252 = vmatmul.f32.gmra.mxu0 %v190
        %v253 = vpop.f32.mrf.mxu0
        %v254 = vadd.f32 0.0, %v253
        %255 = vmatmul.f32.gmra.mxu0 %v191
        %v256 = vpop.f32.mrf.mxu0
        %v257 = vadd.f32 0.0, %v256
        %258 = vmatmul.f32.gmra.mxu0 %v192
        %v259 = vpop.f32.mrf.mxu0
        %v260 = vadd.f32 0.0, %v259
        %261 = vmatmul.f32.gmra.mxu0 %v193
        %v262 = vpop.f32.mrf.mxu0
        %v263 = vadd.f32 0.0, %v262
        %264 = vmatmul.f32.gmra.mxu0 %v194
        %v265 = vpop.f32.mrf.mxu0
        %v266 = vadd.f32 0.0, %v265
        %267 = vmatmul.f32.gmra.mxu0 %v195
        %v268 = vpop.f32.mrf.mxu0
        %v269 = vadd.f32 0.0, %v268
        %270 = vmatmul.f32.gmra.mxu0 %v196
        %v271 = vpop.f32.mrf.mxu0
        %v272 = vadd.f32 0.0, %v271
        %273 = vmatmul.f32.gmra.mxu0 %v197
        %v274 = vpop.f32.mrf.mxu0
        %v275 = vadd.f32 0.0, %v274
        %276 = vmatmul.f32.gmra.mxu0 %v198
        %v277 = vpop.f32.mrf.mxu0
        %v278 = vadd.f32 0.0, %v277
        %279 = vdwg.mxu0
        %280 = vst [vmem:[%s180] sm:$0xff] %v233
        %281 = vst [vmem:[%s180 + $0x8] sm:$0xff] %v236
        %282 = vst [vmem:[%s180 + $0x10] sm:$0xff] %v239
        %283 = vst [vmem:[%s180 + $0x18] sm:$0xff] %v242
        %284 = vst [vmem:[%s180 + $0x20] sm:$0xff] %v245
        %285 = vst [vmem:[%s180 + $0x28] sm:$0xff] %v248
        %286 = vst [vmem:[%s180 + $0x30] sm:$0xff] %v251
        %287 = vst [vmem:[%s180 + $0x38] sm:$0xff] %v254
        %288 = vst [vmem:[%s180 + $0x40] sm:$0xff] %v257
        %289 = vst [vmem:[%s180 + $0x48] sm:$0xff] %v260
        %290 = vst [vmem:[%s180 + $0x50] sm:$0xff] %v263
        %291 = vst [vmem:[%s180 + $0x58] sm:$0xff] %v266
        %292 = vst [vmem:[%s180 + $0x60] sm:$0xff] %v269
        %293 = vst [vmem:[%s180 + $0x68] sm:$0xff] %v272
        %294 = vst [vmem:[%s180 + $0x70] sm:$0xff] %v275
        %295 = vst [vmem:[%s180 + $0x78] sm:$0xff] %v278
        %s296 = sand.u32 %s75, 1
        %s297 = scalar_lea.sflag [#allocation4], %s296
        %s298 = sand.u32 %s75, 1
        %s299 = smul.addr %s298, 128
        %s300 = scalar_lea.vmem [#allocation7], %s299
        // Predicated region
        $region37: #{tpu_custom_call.1} parent=27 // pred_check
          %p301 = pneg %p85
        $region38: #{tpu_custom_call.1} parent=27 // pred_check_branch
          %303 = sbr.rel (%p301) target = $region40
        $region39: #{tpu_custom_call.1} parent=27 // pred_region
          %s304 = smul.u32 16, %s20
          %306 = vsyncadd %s297, 0
          %s307 = smul.addr %s304, 8
          %s308 = scalar_lea.hbm %s2, %s307
          %s309 = sshll.u32 %s300, 4
          %s310 = int_to_ptr.vmem [resolvable:$true] %s309
          %s311 = sshll.u32 %s308, 4
          %s312 = int_to_ptr.hbm [resolvable:$true] %s311
          %317 = dma.vmem_to_hbm [thread:$0]  %s310, 2048, %s312, %s297, 128, 128, 8
        $region40: #{tpu_custom_call.1} parent=27 // pred_fallthru
          _
      $region28: #{tpu_custom_call.1} parent=5 // pred_fallthru
        _
      %p318 = scmp.le.s32.totalorder 2, %s15
      // Predicated region
      $region41: #{tpu_custom_call.1} parent=5 // pred_check
        %p319 = pneg %p318
      $region42: #{tpu_custom_call.1} parent=5 // pred_check_branch
        %321 = sbr.rel (%p319) target = $region44
      $region43: #{tpu_custom_call.1} parent=5 // pred_region
        %s322 = ssub.s32 %s15, 2
        // Predicated region
        $region45: #{tpu_custom_call.1} parent=43 // pred_check
          %p323 = pneg %p91
        $region46: #{tpu_custom_call.1} parent=43 // pred_check_branch
          %325 = sbr.rel (%p323) target = $region48
        $region47: #{tpu_custom_call.1} parent=43 // pred_region
          %s326 = sand.u32 %s76, 1
          %s327 = scalar_lea.sflag [#allocation4], %s326
          %s328 = sand.u32 %s76, 1
          %s329 = smul.addr %s328, 128
          %s330 = scalar_lea.vmem [#allocation7], %s329
          %332 = dma.done %s327, 2048
        $region48: #{tpu_custom_call.1} parent=43 // pred_fallthru
          _
      $region44: #{tpu_custom_call.1} parent=5 // pred_fallthru
        _
    $region6: #{tpu_custom_call.1} parent=1 // loop_footer
      %s19 = sadd.s32 1, %s15
    $region7: #{tpu_custom_call.1} parent=1 // loop_footer_branch
      %14 = sbr.rel target = $region3
    $region8: #{tpu_custom_call.1} parent=1 // loop_exit
      _
    %333 = vsyncpa [#allocation3], 1
    %s334 = scalar_lea.sflag [#allocation3], 1
    %335 = vsyncpa %s334, 1
    %336 = vsyncpa [#allocation6], 1
    %337 = vsyncpa [#allocation4], 1
    %s338 = scalar_lea.sflag [#allocation4], 1
    %339 = vsyncpa %s338, 1

</llo_original>
